<compile_context>
chip_gen: v7x
topology: tpu7x:2x2x1
jax: 0.10.0
libtpu: 0.0.40
codegen_flags: <defaults>
</compile_context>

<pallas_src>
import jax
import jax.numpy as jnp
from jax.experimental import pallas as pl
from jax.experimental.pallas import tpu as pltpu

CLASS_NUM = 10
K_PAD = 128      # lane-aligned padded input-feature width (class_num=10 -> 128)
OUT_PAD = 128    # lane-dense padded output width (real logits live in [:, :2])


def _encoder_kernel(x_ref, w1, b1, w2, b2, w3, b3, w4, b4, out_ref):
    """Encoder_Component: Linear(10->256) ReLU Linear(256->128) ReLU
    Linear(128->64) ReLU Linear(64->2), on a (TILE_B, K_PAD) activation tile."""

    def layer(a, w_ref, b_ref, relu):
        y = jnp.dot(a.astype(jnp.bfloat16), w_ref[...],
                    preferred_element_type=jnp.float32) + b_ref[...]
        return jnp.maximum(y, 0.0) if relu else y

    h = layer(x_ref[...], w1, b1, True)      # (TILE_B, 256)
    h = layer(h, w2, b2, True)               # (TILE_B, 128)
    h = layer(h, w3, b3, True)               # (TILE_B, 64)
    out_ref[...] = layer(h, w4, b4, False)   # (TILE_B, OUT_PAD), cols >=2 are zero


def _round_up(x, m):
    return (x + m - 1) // m * m


def init_encoder_params(key, class_num=CLASS_NUM):
    """Deterministic synthetic Encoder_Component params (nn.Linear uniform init),
    stored (in_features, out_features) with (1, out) bias rows, f32."""
    layer_dims = [(class_num, 256), (256, 128), (128, 64), (64, 2)]
    keys = jax.random.split(key, 2 * len(layer_dims))
    params = []
    for idx, (fan_in, fan_out) in enumerate(layer_dims):
        bound = 1.0 / (fan_in ** 0.5)
        w = jax.random.uniform(keys[2 * idx], (fan_in, fan_out), jnp.float32,
                               minval=-bound, maxval=bound)
        b = jax.random.uniform(keys[2 * idx + 1], (1, fan_out), jnp.float32,
                               minval=-bound, maxval=bound)
        params += [w, b]
    return params


def prepare_encoder_params(raw_params, class_num=CLASS_NUM):
    """Pad + cast raw f32 encoder params for the kernel.

    w1 K-padded class_num -> K_PAD (zero rows), w4/b4 N-padded 2 -> OUT_PAD
    (zero cols).  Weights -> bf16 (MXU operands), biases stay f32.
    """
    w1, b1, w2, b2, w3, b3, w4, b4 = raw_params
    w1p = jnp.pad(w1, ((0, K_PAD - class_num), (0, 0))).astype(jnp.bfloat16)
    w4p = jnp.pad(w4, ((0, 0), (0, OUT_PAD - w4.shape[1]))).astype(jnp.bfloat16)
    b4p = jnp.pad(b4, ((0, 0), (0, OUT_PAD - b4.shape[1]))).astype(jnp.float32)
    return [
        w1p, b1.astype(jnp.float32),
        w2.astype(jnp.bfloat16), b2.astype(jnp.float32),
        w3.astype(jnp.bfloat16), b3.astype(jnp.float32),
        w4p, b4p,
    ]


def shadow_attack_forward(output, prediction, enc_params, *, tile_b=256):
    """Matches ShadowAttackModel.forward: returns Encoder_Component(output),
    shape (batch, 2) f32.  `prediction` does not influence the returned tensor
    in the reference forward, so it is not consumed here."""
    del prediction  # dead in the PyTorch forward (final_inputs is never used)
    batch, feat = output.shape

    # Note: at tiny batches (e.g. 8) this call is launch/DMA-latency bound; for
    # real deployments batch many requests per call (tile_b >= 256).
    tile_b = min(tile_b, _round_up(batch, 8))
    b_pad = _round_up(batch, tile_b)

    # Lane-align input features (class_num -> K_PAD) and pad batch to the grid.
    x = jnp.pad(output.astype(jnp.float32),
                ((0, b_pad - batch), (0, K_PAD - feat)))

    grid = (b_pad // tile_b,)
    x_spec = pl.BlockSpec((tile_b, K_PAD), lambda i: (i, 0))
    # Weights/biases are tiny (<100 KB total): constant index_map keeps them
    # VMEM-resident across all batch tiles.
    param_specs = [pl.BlockSpec(p.shape, lambda i: (0, 0)) for p in enc_params]
    out_spec = pl.BlockSpec((tile_b, OUT_PAD), lambda i: (i, 0))

    out_padded = pl.pallas_call(
        _encoder_kernel,
        out_shape=jax.ShapeDtypeStruct((b_pad, OUT_PAD), jnp.float32),
        grid=grid,
        in_specs=[x_spec] + param_specs,
        out_specs=out_spec,
        compiler_params=pltpu.CompilerParams(
            dimension_semantics=("parallel",)),  # batch sharding across v7x's 2 TCs
    )(x, *enc_params)

    # Strip batch padding and the lane-dense output padding.
    return out_padded[:batch, :2]


if __name__ == "__main__":
    key = jax.random.PRNGKey(0)
    k_out, k_pred, k_param = jax.random.split(key, 3)

    batch = 8
    # `output` is a posterior vector of size class_num, `prediction` a scalar label/conf.
    output = jax.random.normal(k_out, (batch, CLASS_NUM), jnp.float32)
    prediction = jax.random.normal(k_pred, (batch, 1), jnp.float32)

    raw_params = init_encoder_params(k_param, CLASS_NUM)
    enc_params = prepare_encoder_params(raw_params, CLASS_NUM)

    result = shadow_attack_forward(output, prediction, enc_params)
    jax.block_until_ready(result)
    assert result.shape == (batch, 2) and result.dtype == jnp.float32
    print("KERNEL_OK")
</pallas_src>

<mosaic_0001>
module attributes {stable_mosaic.version = 11 : i64} {
  func.func @_encoder_kernel(%arg0: i32, %arg1: memref<8x128xf32, #tpu.memory_space<vmem>>, %arg2: memref<128x256xbf16, #tpu.memory_space<vmem>>, %arg3: memref<1x256xf32, #tpu.memory_space<vmem>>, %arg4: memref<256x128xbf16, #tpu.memory_space<vmem>>, %arg5: memref<1x128xf32, #tpu.memory_space<vmem>>, %arg6: memref<128x64xbf16, #tpu.memory_space<vmem>>, %arg7: memref<1x64xf32, #tpu.memory_space<vmem>>, %arg8: memref<64x128xbf16, #tpu.memory_space<vmem>>, %arg9: memref<1x128xf32, #tpu.memory_space<vmem>>, %arg10: memref<8x128xf32, #tpu.memory_space<vmem>>) attributes {dimension_semantics = [#tpu.dimension_semantics<parallel>], iteration_bounds = array<i64: 1>, scalar_prefetch = 0 : i64, scratch_operands = 0 : i64, tpu.core_type = #tpu.core_type<tc>, window_params = [{transform_indices = @transform_0, window_bounds = array<i64: 8, 128>}, {pipeline_mode = #tpu.pipeline_mode<synchronous>, transform_indices = @transform_1, window_bounds = array<i64: 128, 256>}, {pipeline_mode = #tpu.pipeline_mode<synchronous>, transform_indices = @transform_2, window_bounds = array<i64: 1, 256>}, {pipeline_mode = #tpu.pipeline_mode<synchronous>, transform_indices = @transform_3, window_bounds = array<i64: 256, 128>}, {pipeline_mode = #tpu.pipeline_mode<synchronous>, transform_indices = @transform_4, window_bounds = array<i64: 1, 128>}, {pipeline_mode = #tpu.pipeline_mode<synchronous>, transform_indices = @transform_5, window_bounds = array<i64: 128, 64>}, {pipeline_mode = #tpu.pipeline_mode<synchronous>, transform_indices = @transform_6, window_bounds = array<i64: 1, 64>}, {pipeline_mode = #tpu.pipeline_mode<synchronous>, transform_indices = @transform_7, window_bounds = array<i64: 64, 128>}, {pipeline_mode = #tpu.pipeline_mode<synchronous>, transform_indices = @transform_8, window_bounds = array<i64: 1, 128>}, {transform_indices = @transform_9, window_bounds = array<i64: 8, 128>}]} {
    %c0 = arith.constant 0 : index
    %c0_0 = arith.constant 0 : index
    %0 = vector.load %arg1[%c0, %c0_0] : memref<8x128xf32, #tpu.memory_space<vmem>>, vector<8x128xf32>
    %1 = arith.truncf %0 : vector<8x128xf32> to vector<8x128xbf16>
    %c0_1 = arith.constant 0 : index
    %c0_2 = arith.constant 0 : index
    %2 = vector.load %arg2[%c0_1, %c0_2] : memref<128x256xbf16, #tpu.memory_space<vmem>>, vector<128x256xbf16>
    %cst = arith.constant dense<0.000000e+00> : vector<8x256xf32>
    %3 = tpu.matmul %1, %2, %cst {dimension_numbers = #tpu.dot_dimension_numbers<[1], [0], [0], [1], [0, 0, 1, 1], [], []>} : vector<8x128xbf16>, vector<128x256xbf16>, vector<8x256xf32> -> vector<8x256xf32>
    %c0_3 = arith.constant 0 : index
    %c0_4 = arith.constant 0 : index
    %4 = vector.load %arg3[%c0_3, %c0_4] : memref<1x256xf32, #tpu.memory_space<vmem>>, vector<1x256xf32>
    %5 = vector.broadcast %4 : vector<1x256xf32> to vector<8x256xf32>
    %6 = arith.addf %3, %5 : vector<8x256xf32>
    %cst_5 = arith.constant 0.000000e+00 : f32
    %7 = vector.broadcast %cst_5 : f32 to vector<8x256xf32>
    %8 = arith.maximumf %6, %7 : vector<8x256xf32>
    %9 = arith.truncf %8 : vector<8x256xf32> to vector<8x256xbf16>
    %c0_6 = arith.constant 0 : index
    %c0_7 = arith.constant 0 : index
    %10 = vector.load %arg4[%c0_6, %c0_7] : memref<256x128xbf16, #tpu.memory_space<vmem>>, vector<256x128xbf16>
    %cst_8 = arith.constant dense<0.000000e+00> : vector<8x128xf32>
    %11 = tpu.matmul %9, %10, %cst_8 {dimension_numbers = #tpu.dot_dimension_numbers<[1], [0], [0], [1], [0, 0, 1, 1], [], []>} : vector<8x256xbf16>, vector<256x128xbf16>, vector<8x128xf32> -> vector<8x128xf32>
    %c0_9 = arith.constant 0 : index
    %c0_10 = arith.constant 0 : index
    %12 = vector.load %arg5[%c0_9, %c0_10] : memref<1x128xf32, #tpu.memory_space<vmem>>, vector<1x128xf32>
    %13 = vector.broadcast %12 : vector<1x128xf32> to vector<8x128xf32>
    %14 = arith.addf %11, %13 : vector<8x128xf32>
    %cst_11 = arith.constant 0.000000e+00 : f32
    %15 = vector.broadcast %cst_11 : f32 to vector<8x128xf32>
    %16 = arith.maximumf %14, %15 : vector<8x128xf32>
    %17 = arith.truncf %16 : vector<8x128xf32> to vector<8x128xbf16>
    %c0_12 = arith.constant 0 : index
    %c0_13 = arith.constant 0 : index
    %18 = vector.load %arg6[%c0_12, %c0_13] : memref<128x64xbf16, #tpu.memory_space<vmem>>, vector<128x64xbf16>
    %cst_14 = arith.constant dense<0.000000e+00> : vector<8x64xf32>
    %19 = tpu.matmul %17, %18, %cst_14 {dimension_numbers = #tpu.dot_dimension_numbers<[1], [0], [0], [1], [0, 0, 1, 1], [], []>} : vector<8x128xbf16>, vector<128x64xbf16>, vector<8x64xf32> -> vector<8x64xf32>
    %c0_15 = arith.constant 0 : index
    %c0_16 = arith.constant 0 : index
    %20 = vector.load %arg7[%c0_15, %c0_16] : memref<1x64xf32, #tpu.memory_space<vmem>>, vector<1x64xf32>
    %21 = vector.broadcast %20 : vector<1x64xf32> to vector<8x64xf32>
    %22 = arith.addf %19, %21 : vector<8x64xf32>
    %cst_17 = arith.constant 0.000000e+00 : f32
    %23 = vector.broadcast %cst_17 : f32 to vector<8x64xf32>
    %24 = arith.maximumf %22, %23 : vector<8x64xf32>
    %25 = arith.truncf %24 : vector<8x64xf32> to vector<8x64xbf16>
    %c0_18 = arith.constant 0 : index
    %c0_19 = arith.constant 0 : index
    %26 = vector.load %arg8[%c0_18, %c0_19] : memref<64x128xbf16, #tpu.memory_space<vmem>>, vector<64x128xbf16>
    %cst_20 = arith.constant dense<0.000000e+00> : vector<8x128xf32>
    %27 = tpu.matmul %25, %26, %cst_20 {dimension_numbers = #tpu.dot_dimension_numbers<[1], [0], [0], [1], [0, 0, 1, 1], [], []>} : vector<8x64xbf16>, vector<64x128xbf16>, vector<8x128xf32> -> vector<8x128xf32>
    %c0_21 = arith.constant 0 : index
    %c0_22 = arith.constant 0 : index
    %28 = vector.load %arg9[%c0_21, %c0_22] : memref<1x128xf32, #tpu.memory_space<vmem>>, vector<1x128xf32>
    %29 = vector.broadcast %28 : vector<1x128xf32> to vector<8x128xf32>
    %30 = arith.addf %27, %29 : vector<8x128xf32>
    %c0_23 = arith.constant 0 : index
    %c0_24 = arith.constant 0 : index
    %31 = vector.load %arg10[%c0_23, %c0_24] : memref<8x128xf32, #tpu.memory_space<vmem>>, vector<8x128xf32>
    tpu.vector_store %arg10[%c0_23, %c0_24], %30 {strides = array<i32>} : memref<8x128xf32, #tpu.memory_space<vmem>>, vector<8x128xf32>,
    return
  }
  func.func @transform_0(%arg0: i32) -> (i32, i32) {
    %c0_i32 = arith.constant 0 : i32
    %c0_i32_0 = arith.constant 0 : i32
    return %arg0, %c0_i32 : i32, i32
  }
  func.func @transform_1(%arg0: i32) -> (i32, i32) {
    %c0_i32 = arith.constant 0 : i32
    %c0_i32_0 = arith.constant 0 : i32
    %c0_i32_1 = arith.constant 0 : i32
    return %c0_i32, %c0_i32_0 : i32, i32
  }
  func.func @transform_2(%arg0: i32) -> (i32, i32) {
    %c0_i32 = arith.constant 0 : i32
    %c0_i32_0 = arith.constant 0 : i32
    %c0_i32_1 = arith.constant 0 : i32
    return %c0_i32, %c0_i32_0 : i32, i32
  }
  func.func @transform_3(%arg0: i32) -> (i32, i32) {
    %c0_i32 = arith.constant 0 : i32
    %c0_i32_0 = arith.constant 0 : i32
    %c0_i32_1 = arith.constant 0 : i32
    return %c0_i32, %c0_i32_0 : i32, i32
  }
  func.func @transform_4(%arg0: i32) -> (i32, i32) {
    %c0_i32 = arith.constant 0 : i32
    %c0_i32_0 = arith.constant 0 : i32
    %c0_i32_1 = arith.constant 0 : i32
    return %c0_i32, %c0_i32_0 : i32, i32
  }
  func.func @transform_5(%arg0: i32) -> (i32, i32) {
    %c0_i32 = arith.constant 0 : i32
    %c0_i32_0 = arith.constant 0 : i32
    %c0_i32_1 = arith.constant 0 : i32
    return %c0_i32, %c0_i32_0 : i32, i32
  }
  func.func @transform_6(%arg0: i32) -> (i32, i32) {
    %c0_i32 = arith.constant 0 : i32
    %c0_i32_0 = arith.constant 0 : i32
    %c0_i32_1 = arith.constant 0 : i32
    return %c0_i32, %c0_i32_0 : i32, i32
  }
  func.func @transform_7(%arg0: i32) -> (i32, i32) {
    %c0_i32 = arith.constant 0 : i32
    %c0_i32_0 = arith.constant 0 : i32
    %c0_i32_1 = arith.constant 0 : i32
    return %c0_i32, %c0_i32_0 : i32, i32
  }
  func.func @transform_8(%arg0: i32) -> (i32, i32) {
    %c0_i32 = arith.constant 0 : i32
    %c0_i32_0 = arith.constant 0 : i32
    %c0_i32_1 = arith.constant 0 : i32
    return %c0_i32, %c0_i32_0 : i32, i32
  }
  func.func @transform_9(%arg0: i32) -> (i32, i32) {
    %c0_i32 = arith.constant 0 : i32
    %c0_i32_0 = arith.constant 0 : i32
    return %arg0, %c0_i32 : i32, i32
  }
}

</mosaic_0001>

<llo_original>
// kernel: tpu_custom_call.1
$region0: #{tpu_custom_call.1}
  #allocation0 [shape = 'u32[]', space=smem, size = 0x4, offset = 0x4, fixed_abs, tag = 'smem constant byte address 0x4 - core index']
  #allocation1 [shape = 'u32[144,128]{1,0:T(1,128)}', space=vmem, size = 0x12000, scoped, tag = 'internal scratch']
  %s0 = inlined_call_operand.vmem [shape: f32[8,128], index: 0, kind: input, shape index: {}]
  %s1 = inlined_call_operand.hbm [shape: bf16[128,256], index: 1, kind: input, shape index: {}]
  %s2 = inlined_call_operand.vmem [shape: f32[1,256], index: 2, kind: input, shape index: {}]
  %s3 = inlined_call_operand.hbm [shape: bf16[256,128], index: 3, kind: input, shape index: {}]
  %s4 = inlined_call_operand.vmem [shape: f32[1,128], index: 4, kind: input, shape index: {}]
  %s5 = inlined_call_operand.vmem [shape: bf16[128,64], index: 5, kind: input, shape index: {}]
  %s6 = inlined_call_operand.vmem [shape: f32[1,64], index: 6, kind: input, shape index: {}]
  %s7 = inlined_call_operand.vmem [shape: bf16[64,128], index: 7, kind: input, shape index: {}]
  %s8 = inlined_call_operand.vmem [shape: f32[1,128], index: 8, kind: input, shape index: {}]
  %s9 = inlined_call_operand.hbm [shape: f32[8,128], index: 9, kind: output, shape index: {}]
  %s10 = sld [smem:[#allocation0]]
  $region54: #{tpu_custom_call.1} parent=0
    _
  %s12 = ssub.s32 1, %s10
  %s13 = scalar_select 0, %s12, %s10
  $region1: #{tpu_custom_call.1} parent=0
    #allocation2 [shape = 'u8[65536]{0}', space=vmem, size = 0x10000, scoped, tag = 'input window, operand 1, single buffered']
    #allocation3 [shape = 's32[1]{0}', space=sflag, size = 0x4, scoped, tag = 'scoped memory for tpu_custom_call.1']
    #allocation4 [shape = 's32[1]{0}', space=sflag, size = 0x4, scoped, tag = 'scoped memory for tpu_custom_call.1']
    #allocation5 [shape = 'u8[65536]{0}', space=vmem, size = 0x10000, scoped, tag = 'input window, operand 3, single buffered']
    #allocation6 [shape = 's32[1]{0}', space=sflag, size = 0x4, scoped, tag = 'scoped memory for tpu_custom_call.1']
    #allocation7 [shape = 'u8[4096]{0}', space=vmem, size = 0x1000, scoped, tag = 'output window, operand 0, single buffered']
    %14 = vsyncpa [#allocation3], 0
    %15 = vsyncpa [#allocation6], 0
    %16 = vsyncpa [#allocation4], 0
    // Predicated region
    $region2: #{tpu_custom_call.1} parent=1 // pred_check
      _
    $region3: #{tpu_custom_call.1} parent=1 // pred_check_branch
      %18 = sbr.rel (0) target = $region5
    $region4: #{tpu_custom_call.1} parent=1 // pred_region
      _
    $region5: #{tpu_custom_call.1} parent=1 // pred_fallthru
      _
    // Predicated region
    $region6: #{tpu_custom_call.1} parent=1 // pred_check
      _
    $region7: #{tpu_custom_call.1} parent=1 // pred_check_branch
      %20 = sbr.rel (0) target = $region9
    $region8: #{tpu_custom_call.1} parent=1 // pred_region
      %s22 = ssub.s32 2048, 2048
      %23 = vsyncadd [#allocation3], %s22
      %s24 = sshll.u32 [#allocation2], 4
      %s25 = int_to_ptr.vmem [resolvable:$true] %s24
      %30 = dma.hbm_to_vmem [thread:$0]  %s1, 2048, %s25, [#allocation3], 128, 128, 8
    $region9: #{tpu_custom_call.1} parent=1 // pred_fallthru
      _
    // Predicated region
    $region10: #{tpu_custom_call.1} parent=1 // pred_check
      _
    $region11: #{tpu_custom_call.1} parent=1 // pred_check_branch
      %32 = sbr.rel (0) target = $region13
    $region12: #{tpu_custom_call.1} parent=1 // pred_region
      _
    $region13: #{tpu_custom_call.1} parent=1 // pred_fallthru
      _
    // Predicated region
    $region14: #{tpu_custom_call.1} parent=1 // pred_check
      _
    $region15: #{tpu_custom_call.1} parent=1 // pred_check_branch
      %34 = sbr.rel (0) target = $region17
    $region16: #{tpu_custom_call.1} parent=1 // pred_region
      %s36 = ssub.s32 2048, 2048
      %37 = vsyncadd [#allocation6], %s36
      %s38 = sshll.u32 [#allocation5], 4
      %s39 = int_to_ptr.vmem [resolvable:$true] %s38
      %44 = dma.hbm_to_vmem [thread:$0]  %s3, 2048, %s39, [#allocation6], 64, 64, 4
    $region17: #{tpu_custom_call.1} parent=1 // pred_fallthru
      _
    // Predicated region
    $region18: #{tpu_custom_call.1} parent=1 // pred_check
      _
    $region19: #{tpu_custom_call.1} parent=1 // pred_check_branch
      %46 = sbr.rel (0) target = $region21
    $region20: #{tpu_custom_call.1} parent=1 // pred_region
      _
    $region21: #{tpu_custom_call.1} parent=1 // pred_fallthru
      _
    // Predicated region
    $region22: #{tpu_custom_call.1} parent=1 // pred_check
      _
    $region23: #{tpu_custom_call.1} parent=1 // pred_check_branch
      %48 = sbr.rel (0) target = $region25
    $region24: #{tpu_custom_call.1} parent=1 // pred_region
      _
    $region25: #{tpu_custom_call.1} parent=1 // pred_fallthru
      _
    // Predicated region
    $region26: #{tpu_custom_call.1} parent=1 // pred_check
      _
    $region27: #{tpu_custom_call.1} parent=1 // pred_check_branch
      %50 = sbr.rel (0) target = $region29
    $region28: #{tpu_custom_call.1} parent=1 // pred_region
      _
    $region29: #{tpu_custom_call.1} parent=1 // pred_fallthru
      _
    // Predicated region
    $region30: #{tpu_custom_call.1} parent=1 // pred_check
      _
    $region31: #{tpu_custom_call.1} parent=1 // pred_check_branch
      %52 = sbr.rel (0) target = $region33
    $region32: #{tpu_custom_call.1} parent=1 // pred_region
      _
    $region33: #{tpu_custom_call.1} parent=1 // pred_fallthru
      _
    // Predicated region
    $region34: #{tpu_custom_call.1} parent=1 // pred_check
      _
    $region35: #{tpu_custom_call.1} parent=1 // pred_check_branch
      %54 = sbr.rel (0) target = $region37
    $region36: #{tpu_custom_call.1} parent=1 // pred_region
      _
    $region37: #{tpu_custom_call.1} parent=1 // pred_fallthru
      _
    // Predicated region
    $region38: #{tpu_custom_call.1} parent=1 // pred_check
      _
    $region39: #{tpu_custom_call.1} parent=1 // pred_check_branch
      %56 = sbr.rel (0) target = $region41
    $region40: #{tpu_custom_call.1} parent=1 // pred_region
      %57 = dma.done [#allocation3], 2048
    $region41: #{tpu_custom_call.1} parent=1 // pred_fallthru
      _
    // Predicated region
    $region42: #{tpu_custom_call.1} parent=1 // pred_check
      _
    $region43: #{tpu_custom_call.1} parent=1 // pred_check_branch
      %59 = sbr.rel (0) target = $region45
    $region44: #{tpu_custom_call.1} parent=1 // pred_region
      %60 = dma.done [#allocation6], 2048
    $region45: #{tpu_custom_call.1} parent=1 // pred_fallthru
      _
    %v62 = vld [vmem:[%s0] sm:$0xff]
    %v63 = vpack.c.bf16 %v62, %v62
    %v64 = vld [vmem:[#allocation2] sm:$0xff]
    %v65 = vld [vmem:[#allocation2 + $0x8] sm:$0xff]
    %v66 = vld [vmem:[#allocation2 + $0x10] sm:$0xff]
    %v67 = vld [vmem:[#allocation2 + $0x18] sm:$0xff]
    %v68 = vld [vmem:[#allocation2 + $0x20] sm:$0xff]
    %v69 = vld [vmem:[#allocation2 + $0x28] sm:$0xff]
    %v70 = vld [vmem:[#allocation2 + $0x30] sm:$0xff]
    %v71 = vld [vmem:[#allocation2 + $0x38] sm:$0xff]
    %v72 = vld [vmem:[#allocation2 + $0x40] sm:$0xff]
    %v73 = vld [vmem:[#allocation2 + $0x48] sm:$0xff]
    %v74 = vld [vmem:[#allocation2 + $0x50] sm:$0xff]
    %v75 = vld [vmem:[#allocation2 + $0x58] sm:$0xff]
    %v76 = vld [vmem:[#allocation2 + $0x60] sm:$0xff]
    %v77 = vld [vmem:[#allocation2 + $0x68] sm:$0xff]
    %v78 = vld [vmem:[#allocation2 + $0x70] sm:$0xff]
    %v79 = vld [vmem:[#allocation2 + $0x78] sm:$0xff]
    %v80 = vld [vmem:[%s2] sm:$0x3]
    %v82 = vlaneseq
    %v83 = vshrl.u32 %v82, 7
    %v84 = vsub.s32 0, %v83
    %v85 = vrot.slane %v80, %v84
    %v86 = vlaneseq
    %v87 = vshrl.u32 %v86, 7
    %v88 = vsub.s32 1, %v87
    %v89 = vrot.slane %v80, %v88
    %v108 = vunpack.c.l.b16 %v64
    %v109 = vunpack.c.h.b16 %v64
    %v110 = vunpack.c.l.b16 %v65
    %v111 = vunpack.c.h.b16 %v65
    %v112 = vunpack.c.l.b16 %v66
    %v113 = vunpack.c.h.b16 %v66
    %v114 = vunpack.c.l.b16 %v67
    %v115 = vunpack.c.h.b16 %v67
    %v116 = vunpack.c.l.b16 %v68
    %v117 = vunpack.c.h.b16 %v68
    %v118 = vunpack.c.l.b16 %v69
    %v119 = vunpack.c.h.b16 %v69
    %v120 = vunpack.c.l.b16 %v70
    %v121 = vunpack.c.h.b16 %v70
    %v122 = vunpack.c.l.b16 %v71
    %v123 = vunpack.c.h.b16 %v71
    %v124 = vunpack.c.l.b16 %v72
    %v125 = vunpack.c.h.b16 %v72
    %v126 = vunpack.c.l.b16 %v73
    %v127 = vunpack.c.h.b16 %v73
    %v128 = vunpack.c.l.b16 %v74
    %v129 = vunpack.c.h.b16 %v74
    %v130 = vunpack.c.l.b16 %v75
    %v131 = vunpack.c.h.b16 %v75
    %v132 = vunpack.c.l.b16 %v76
    %v133 = vunpack.c.h.b16 %v76
    %v134 = vunpack.c.l.b16 %v77
    %v135 = vunpack.c.h.b16 %v77
    %v136 = vunpack.c.l.b16 %v78
    %v137 = vunpack.c.h.b16 %v78
    %v138 = vunpack.c.l.b16 %v79
    %v139 = vunpack.c.h.b16 %v79
    %v140 = vpack.c.b16 %v110, %v108
    %v141 = vpack.c.b16 %v111, %v109
    %v142 = vpack.c.b16 %v114, %v112
    %v143 = vpack.c.b16 %v115, %v113
    %v144 = vpack.c.b16 %v118, %v116
    %v145 = vpack.c.b16 %v119, %v117
    %v146 = vpack.c.b16 %v122, %v120
    %v147 = vpack.c.b16 %v123, %v121
    %v148 = vpack.c.b16 %v126, %v124
    %v149 = vpack.c.b16 %v127, %v125
    %v150 = vpack.c.b16 %v130, %v128
    %v151 = vpack.c.b16 %v131, %v129
    %v152 = vpack.c.b16 %v134, %v132
    %v153 = vpack.c.b16 %v135, %v133
    %v154 = vpack.c.b16 %v138, %v136
    %v155 = vpack.c.b16 %v139, %v137
    %172 = vmatprep.subr.bf16.mxu0 %v141
    %173 = vmatpush1.bf16.msra.mxu0 %v140
    %174 = vmatprep.subr.bf16.mxu0 %v143
    %175 = vmatpush1.bf16.msra.mxu0 %v142
    %176 = vmatprep.subr.bf16.mxu0 %v145
    %177 = vmatpush1.bf16.msra.mxu0 %v144
    %178 = vmatprep.subr.bf16.mxu0 %v147
    %179 = vmatpush1.bf16.msra.mxu0 %v146
    %180 = vmatprep.subr.bf16.mxu0 %v149
    %181 = vmatpush1.bf16.msra.mxu0 %v148
    %182 = vmatprep.subr.bf16.mxu0 %v151
    %183 = vmatpush1.bf16.msra.mxu0 %v150
    %184 = vmatprep.subr.bf16.mxu0 %v153
    %185 = vmatpush1.bf16.msra.mxu0 %v152
    %186 = vmatprep.subr.bf16.mxu0 %v155
    %187 = vmatpush1.bf16.msra.mxu0 %v154
    %188 = vmatprep.subr.bf16.mxu0 0
    %189 = vmatpush1.bf16.msra.mxu0 0
    %190 = vmatprep.subr.bf16.mxu0 0
    %191 = vmatpush1.bf16.msra.mxu0 0
    %192 = vmatprep.subr.bf16.mxu0 0
    %193 = vmatpush1.bf16.msra.mxu0 0
    %194 = vmatprep.subr.bf16.mxu0 0
    %195 = vmatpush1.bf16.msra.mxu0 0
    %196 = vmatprep.subr.bf16.mxu0 0
    %197 = vmatpush1.bf16.msra.mxu0 0
    %198 = vmatprep.subr.bf16.mxu0 0
    %199 = vmatpush1.bf16.msra.mxu0 0
    %200 = vmatprep.subr.bf16.mxu0 0
    %201 = vmatpush1.bf16.msra.mxu0 0
    %202 = vmatprep.subr.bf16.mxu0 0
    %203 = vmatpush1.bf16.msra.mxu0 0
    %204 = vmatprep.mubr.bf16.mxu0 0
    %205 = vmatmul.mubr.bf16.gmra.mrb[0].mxu0 %v63
    %v206 = vpop.f32.mrb[0].mxu0
    %v207 = vadd.f32 %v85, %v206
    %v208 = vpop.f32.mrb[0].mxu0
    %v209 = vadd.f32 %v89, %v208
    %v210 = vpop.f32.mrb[0].mxu0
    %v211 = vpop.f32.mrb[0].mxu0
    %212 = vdwg.mxu0
    %v213 = vmax.f32 %v207, 0.0
    %v214 = vmax.f32 %v209, 0.0
    %v215 = vpack.c.bf16 %v213, %v213
    %v216 = vpack.c.bf16 %v214, %v214
    %v217 = vld [vmem:[#allocation5] sm:$0xf]
    %v218 = vld [vmem:[#allocation5 + $0x4] sm:$0xf]
    %v219 = vld [vmem:[#allocation5 + $0x8] sm:$0xf]
    %v220 = vld [vmem:[#allocation5 + $0xc] sm:$0xf]
    %v221 = vld [vmem:[#allocation5 + $0x10] sm:$0xf]
    %v222 = vld [vmem:[#allocation5 + $0x14] sm:$0xf]
    %v223 = vld [vmem:[#allocation5 + $0x18] sm:$0xf]
    %v224 = vld [vmem:[#allocation5 + $0x1c] sm:$0xf]
    %v225 = vld [vmem:[#allocation5 + $0x20] sm:$0xf]
    %v226 = vld [vmem:[#allocation5 + $0x24] sm:$0xf]
    %v227 = vld [vmem:[#allocation5 + $0x28] sm:$0xf]
    %v228 = vld [vmem:[#allocation5 + $0x2c] sm:$0xf]
    %v229 = vld [vmem:[#allocation5 + $0x30] sm:$0xf]
    %v230 = vld [vmem:[#allocation5 + $0x34] sm:$0xf]
    %v231 = vld [vmem:[#allocation5 + $0x38] sm:$0xf]
    %v232 = vld [vmem:[#allocation5 + $0x3c] sm:$0xf]
    %v233 = vld [vmem:[#allocation5 + $0x40] sm:$0xf]
    %v234 = vld [vmem:[#allocation5 + $0x44] sm:$0xf]
    %v235 = vld [vmem:[#allocation5 + $0x48] sm:$0xf]
    %v236 = vld [vmem:[#allocation5 + $0x4c] sm:$0xf]
    %v237 = vld [vmem:[#allocation5 + $0x50] sm:$0xf]
    %v238 = vld [vmem:[#allocation5 + $0x54] sm:$0xf]
    %v239 = vld [vmem:[#allocation5 + $0x58] sm:$0xf]
    %v240 = vld [vmem:[#allocation5 + $0x5c] sm:$0xf]
    %v241 = vld [vmem:[#allocation5 + $0x60] sm:$0xf]
    %v242 = vld [vmem:[#allocation5 + $0x64] sm:$0xf]
    %v243 = vld [vmem:[#allocation5 + $0x68] sm:$0xf]
    %v244 = vld [vmem:[#allocation5 + $0x6c] sm:$0xf]
    %v245 = vld [vmem:[#allocation5 + $0x70] sm:$0xf]
    %v246 = vld [vmem:[#allocation5 + $0x74] sm:$0xf]
    %v247 = vld [vmem:[#allocation5 + $0x78] sm:$0xf]
    %v248 = vld [vmem:[#allocation5 + $0x7c] sm:$0xf]
    %v249 = vld [vmem:[%s4] sm:$0x1]
    %v251 = vlaneseq
    %v252 = vshrl.u32 %v251, 7
    %v253 = vsub.s32 0, %v252
    %v254 = vrot.slane %v249, %v253
    %v288 = vunpack.c.l.b16 %v217
    %v289 = vunpack.c.l.b16 %v218
    %v290 = vunpack.c.l.b16 %v219
    %v291 = vunpack.c.l.b16 %v220
    %v292 = vunpack.c.l.b16 %v221
    %v293 = vunpack.c.l.b16 %v222
    %v294 = vunpack.c.l.b16 %v223
    %v295 = vunpack.c.l.b16 %v224
    %v296 = vunpack.c.l.b16 %v225
    %v297 = vunpack.c.l.b16 %v226
    %v298 = vunpack.c.l.b16 %v227
    %v299 = vunpack.c.l.b16 %v228
    %v300 = vunpack.c.l.b16 %v229
    %v301 = vunpack.c.l.b16 %v230
    %v302 = vunpack.c.l.b16 %v231
    %v303 = vunpack.c.l.b16 %v232
    %v304 = vunpack.c.l.b16 %v233
    %v305 = vunpack.c.l.b16 %v234
    %v306 = vunpack.c.l.b16 %v235
    %v307 = vunpack.c.l.b16 %v236
    %v308 = vunpack.c.l.b16 %v237
    %v309 = vunpack.c.l.b16 %v238
    %v310 = vunpack.c.l.b16 %v239
    %v311 = vunpack.c.l.b16 %v240
    %v312 = vunpack.c.l.b16 %v241
    %v313 = vunpack.c.l.b16 %v242
    %v314 = vunpack.c.l.b16 %v243
    %v315 = vunpack.c.l.b16 %v244
    %v316 = vunpack.c.l.b16 %v245
    %v317 = vunpack.c.l.b16 %v246
    %v318 = vunpack.c.l.b16 %v247
    %v319 = vunpack.c.l.b16 %v248
    %v320 = vpack.c.b16 %v289, %v288
    %v321 = vpack.c.b16 %v291, %v290
    %v322 = vpack.c.b16 %v293, %v292
    %v323 = vpack.c.b16 %v295, %v294
    %v324 = vpack.c.b16 %v297, %v296
    %v325 = vpack.c.b16 %v299, %v298
    %v326 = vpack.c.b16 %v301, %v300
    %v327 = vpack.c.b16 %v303, %v302
    %v328 = vpack.c.b16 %v305, %v304
    %v329 = vpack.c.b16 %v307, %v306
    %v330 = vpack.c.b16 %v309, %v308
    %v331 = vpack.c.b16 %v311, %v310
    %v332 = vpack.c.b16 %v313, %v312
    %v333 = vpack.c.b16 %v315, %v314
    %v334 = vpack.c.b16 %v317, %v316
    %v335 = vpack.c.b16 %v319, %v318
    %352 = vmatprep.subr.bf16.mxu0 0
    %353 = vmatpush1.bf16.msra.mxu0 %v320
    %354 = vmatprep.subr.bf16.mxu0 0
    %355 = vmatpush1.bf16.msra.mxu0 %v321
    %356 = vmatprep.subr.bf16.mxu0 0
    %357 = vmatpush1.bf16.msra.mxu0 %v322
    %358 = vmatprep.subr.bf16.mxu0 0
    %359 = vmatpush1.bf16.msra.mxu0 %v323
    %360 = vmatprep.subr.bf16.mxu0 0
    %361 = vmatpush1.bf16.msra.mxu0 %v324
    %362 = vmatprep.subr.bf16.mxu0 0
    %363 = vmatpush1.bf16.msra.mxu0 %v325
    %364 = vmatprep.subr.bf16.mxu0 0
    %365 = vmatpush1.bf16.msra.mxu0 %v326
    %366 = vmatprep.subr.bf16.mxu0 0
    %367 = vmatpush1.bf16.msra.mxu0 %v327
    %368 = vmatprep.subr.bf16.mxu0 0
    %369 = vmatpush1.bf16.msra.mxu0 %v328
    %370 = vmatprep.subr.bf16.mxu0 0
    %371 = vmatpush1.bf16.msra.mxu0 %v329
    %372 = vmatprep.subr.bf16.mxu0 0
    %373 = vmatpush1.bf16.msra.mxu0 %v330
    %374 = vmatprep.subr.bf16.mxu0 0
    %375 = vmatpush1.bf16.msra.mxu0 %v331
    %376 = vmatprep.subr.bf16.mxu0 0
    %377 = vmatpush1.bf16.msra.mxu0 %v332
    %378 = vmatprep.subr.bf16.mxu0 0
    %379 = vmatpush1.bf16.msra.mxu0 %v333
    %380 = vmatprep.subr.bf16.mxu0 0
    %381 = vmatpush1.bf16.msra.mxu0 %v334
    %382 = vmatprep.subr.bf16.mxu0 0
    %383 = vmatpush1.bf16.msra.mxu0 %v335
    %384 = vmatprep.mubr.bf16.mxu0 %v216
    %385 = vmatmul.mubr.bf16.gmra.mrb[0].mxu0 %v215
    %v386 = vpop.f32.mrb[0].mxu0
    %v387 = vadd.f32 %v254, %v386
    %v388 = vpop.f32.mrb[0].mxu0
    %v389 = vpop.f32.mrb[0].mxu0
    %v390 = vpop.f32.mrb[0].mxu0
    %391 = vdwg.mxu0
    %v392 = vmax.f32 %v387, 0.0
    %v393 = vpack.c.bf16 %v392, %v392
    %v394 = vld [vmem:[%s5] sm:$0xf]
    %v395 = vld [vmem:[%s5 + $0x4] sm:$0xf]
    %v396 = vld [vmem:[%s5 + $0x8] sm:$0xf]
    %v397 = vld [vmem:[%s5 + $0xc] sm:$0xf]
    %v398 = vld [vmem:[%s5 + $0x10] sm:$0xf]
    %v399 = vld [vmem:[%s5 + $0x14] sm:$0xf]
    %v400 = vld [vmem:[%s5 + $0x18] sm:$0xf]
    %v401 = vld [vmem:[%s5 + $0x1c] sm:$0xf]
    %v402 = vld [vmem:[%s5 + $0x20] sm:$0xf]
    %v403 = vld [vmem:[%s5 + $0x24] sm:$0xf]
    %v404 = vld [vmem:[%s5 + $0x28] sm:$0xf]
    %v405 = vld [vmem:[%s5 + $0x2c] sm:$0xf]
    %v406 = vld [vmem:[%s5 + $0x30] sm:$0xf]
    %v407 = vld [vmem:[%s5 + $0x34] sm:$0xf]
    %v408 = vld [vmem:[%s5 + $0x38] sm:$0xf]
    %v409 = vld [vmem:[%s5 + $0x3c] sm:$0xf]
    %v410 = vld [vmem:[%s6] sm:$0x1]
    %v412 = vlaneseq
    %v413 = vshrl.u32 %v412, 7
    %v414 = vsub.s32 0, %v413
    %v415 = vrot.slane %v410, %v414
    %v433 = vunpack.c.l.b16 %v394
    %v434 = vunpack.c.l.b16 %v395
    %v435 = vunpack.c.l.b16 %v396
    %v436 = vunpack.c.l.b16 %v397
    %v437 = vunpack.c.l.b16 %v398
    %v438 = vunpack.c.l.b16 %v399
    %v439 = vunpack.c.l.b16 %v400
    %v440 = vunpack.c.l.b16 %v401
    %v441 = vunpack.c.l.b16 %v402
    %v442 = vunpack.c.l.b16 %v403
    %v443 = vunpack.c.l.b16 %v404
    %v444 = vunpack.c.l.b16 %v405
    %v445 = vunpack.c.l.b16 %v406
    %v446 = vunpack.c.l.b16 %v407
    %v447 = vunpack.c.l.b16 %v408
    %v448 = vunpack.c.l.b16 %v409
    %v449 = vpack.c.b16 %v434, %v433
    %v450 = vpack.c.b16 %v436, %v435
    %v451 = vpack.c.b16 %v438, %v437
    %v452 = vpack.c.b16 %v440, %v439
    %v453 = vpack.c.b16 %v442, %v441
    %v454 = vpack.c.b16 %v444, %v443
    %v455 = vpack.c.b16 %v446, %v445
    %v456 = vpack.c.b16 %v448, %v447
    %465 = vmatprep.subr.bf16.mxu0 0
    %466 = vmatpush1.bf16.msra.mxu0 %v449
    %467 = vmatprep.subr.bf16.mxu0 0
    %468 = vmatpush1.bf16.msra.mxu0 %v450
    %469 = vmatprep.subr.bf16.mxu0 0
    %470 = vmatpush1.bf16.msra.mxu0 %v451
    %471 = vmatprep.subr.bf16.mxu0 0
    %472 = vmatpush1.bf16.msra.mxu0 %v452
    %473 = vmatprep.subr.bf16.mxu0 0
    %474 = vmatpush1.bf16.msra.mxu0 %v453
    %475 = vmatprep.subr.bf16.mxu0 0
    %476 = vmatpush1.bf16.msra.mxu0 %v454
    %477 = vmatprep.subr.bf16.mxu0 0
    %478 = vmatpush1.bf16.msra.mxu0 %v455
    %479 = vmatprep.subr.bf16.mxu0 0
    %480 = vmatpush1.bf16.msra.mxu0 %v456
    %481 = vmatprep.subr.bf16.mxu0 0
    %482 = vmatpush1.bf16.msra.mxu0 0
    %483 = vmatprep.subr.bf16.mxu0 0
    %484 = vmatpush1.bf16.msra.mxu0 0
    %485 = vmatprep.subr.bf16.mxu0 0
    %486 = vmatpush1.bf16.msra.mxu0 0
    %487 = vmatprep.subr.bf16.mxu0 0
    %488 = vmatpush1.bf16.msra.mxu0 0
    %489 = vmatprep.subr.bf16.mxu0 0
    %490 = vmatpush1.bf16.msra.mxu0 0
    %491 = vmatprep.subr.bf16.mxu0 0
    %492 = vmatpush1.bf16.msra.mxu0 0
    %493 = vmatprep.subr.bf16.mxu0 0
    %494 = vmatpush1.bf16.msra.mxu0 0
    %495 = vmatprep.subr.bf16.mxu0 0
    %496 = vmatpush1.bf16.msra.mxu0 0
    %497 = vmatprep.mubr.bf16.mxu0 0
    %498 = vmatmul.mubr.bf16.gmra.mrb[0].mxu0 %v393
    %v499 = vpop.f32.mrb[0].mxu0
    %v500 = vadd.f32 %v415, %v499
    %v501 = vpop.f32.mrb[0].mxu0
    %v502 = vpop.f32.mrb[0].mxu0
    %v503 = vpop.f32.mrb[0].mxu0
    %504 = vdwg.mxu0
    %v505 = vmax.f32 %v500, 0.0
    %v506 = vpack.c.bf16 %v505, %v505
    %v507 = vld [vmem:[%s7] sm:$0xf]
    %v508 = vld [vmem:[%s7 + $0x4] sm:$0xf]
    %v509 = vld [vmem:[%s7 + $0x8] sm:$0xf]
    %v510 = vld [vmem:[%s7 + $0xc] sm:$0xf]
    %v511 = vld [vmem:[%s7 + $0x10] sm:$0xf]
    %v512 = vld [vmem:[%s7 + $0x14] sm:$0xf]
    %v513 = vld [vmem:[%s7 + $0x18] sm:$0xf]
    %v514 = vld [vmem:[%s7 + $0x1c] sm:$0xf]
    %v515 = vld [vmem:[%s8] sm:$0x1]
    %v517 = vlaneseq
    %v518 = vshrl.u32 %v517, 7
    %v519 = vsub.s32 0, %v518
    %v520 = vrot.slane %v515, %v519
    %v530 = vunpack.c.l.b16 %v507
    %v531 = vunpack.c.l.b16 %v508
    %v532 = vunpack.c.l.b16 %v509
    %v533 = vunpack.c.l.b16 %v510
    %v534 = vunpack.c.l.b16 %v511
    %v535 = vunpack.c.l.b16 %v512
    %v536 = vunpack.c.l.b16 %v513
    %v537 = vunpack.c.l.b16 %v514
    %v538 = vpack.c.b16 %v531, %v530
    %v539 = vpack.c.b16 %v533, %v532
    %v540 = vpack.c.b16 %v535, %v534
    %v541 = vpack.c.b16 %v537, %v536
    %vm546 = vcmask 523264
    %v548 = vsel %vm546, %v506, 0
    %550 = vmatprep.subr.bf16.mxu0 0
    %551 = vmatpush1.bf16.msra.mxu0 %v538
    %552 = vmatprep.subr.bf16.mxu0 0
    %553 = vmatpush1.bf16.msra.mxu0 %v539
    %554 = vmatprep.subr.bf16.mxu0 0
    %555 = vmatpush1.bf16.msra.mxu0 %v540
    %556 = vmatprep.subr.bf16.mxu0 0
    %557 = vmatpush1.bf16.msra.mxu0 %v541
    %558 = vmatprep.subr.bf16.mxu0 0
    %559 = vmatpush1.bf16.msra.mxu0 0
    %560 = vmatprep.subr.bf16.mxu0 0
    %561 = vmatpush1.bf16.msra.mxu0 0
    %562 = vmatprep.subr.bf16.mxu0 0
    %563 = vmatpush1.bf16.msra.mxu0 0
    %564 = vmatprep.subr.bf16.mxu0 0
    %565 = vmatpush1.bf16.msra.mxu0 0
    %566 = vmatprep.subr.bf16.mxu0 0
    %567 = vmatpush1.bf16.msra.mxu0 0
    %568 = vmatprep.subr.bf16.mxu0 0
    %569 = vmatpush1.bf16.msra.mxu0 0
    %570 = vmatprep.subr.bf16.mxu0 0
    %571 = vmatpush1.bf16.msra.mxu0 0
    %572 = vmatprep.subr.bf16.mxu0 0
    %573 = vmatpush1.bf16.msra.mxu0 0
    %574 = vmatprep.subr.bf16.mxu0 0
    %575 = vmatpush1.bf16.msra.mxu0 0
    %576 = vmatprep.subr.bf16.mxu0 0
    %577 = vmatpush1.bf16.msra.mxu0 0
    %578 = vmatprep.subr.bf16.mxu0 0
    %579 = vmatpush1.bf16.msra.mxu0 0
    %580 = vmatprep.subr.bf16.mxu0 0
    %581 = vmatpush1.bf16.msra.mxu0 0
    %582 = vmatprep.mubr.bf16.mxu0 0
    %583 = vmatmul.mubr.bf16.gmra.mrb[0].mxu0 %v548
    %v584 = vpop.f32.mrb[0].mxu0
    %v585 = vadd.f32 %v520, %v584
    %v586 = vpop.f32.mrb[0].mxu0
    %v587 = vpop.f32.mrb[0].mxu0
    %v588 = vpop.f32.mrb[0].mxu0
    %589 = vdwg.mxu0
    %590 = vst [vmem:[#allocation7] sm:$0xff] %v585
    // Predicated region
    $region46: #{tpu_custom_call.1} parent=1 // pred_check
      _
    $region47: #{tpu_custom_call.1} parent=1 // pred_check_branch
      %592 = sbr.rel (0) target = $region49
    $region48: #{tpu_custom_call.1} parent=1 // pred_region
      %s594 = ssub.s32 128, 128
      %595 = vsyncadd [#allocation4], %s594
      %s597 = sshll.u32 [#allocation7], 4
      %s598 = int_to_ptr.vmem [resolvable:$true] %s597
      %600 = dma.vmem_to_hbm [thread:$0]  %s598, 128, %s9, [#allocation4]
    $region49: #{tpu_custom_call.1} parent=1 // pred_fallthru
      _
    // Predicated region
    $region50: #{tpu_custom_call.1} parent=1 // pred_check
      _
    $region51: #{tpu_custom_call.1} parent=1 // pred_check_branch
      %602 = sbr.rel (0) target = $region53
    $region52: #{tpu_custom_call.1} parent=1 // pred_region
      %603 = dma.done [#allocation4], 128
    $region53: #{tpu_custom_call.1} parent=1 // pred_fallthru
      _
    %604 = vsyncpa [#allocation3], 1
    %605 = vsyncpa [#allocation6], 1
    %606 = vsyncpa [#allocation4], 1

</llo_original>
